<compile_context>
chip_gen: v6e
topology: v6e:2x2x1
jax: 0.10.0
libtpu: 0.0.40
codegen_flags: <defaults>
</compile_context>

<pallas_src>
import jax
import jax.numpy as jnp
from jax import lax
from jax.experimental import pallas as pl
from jax.experimental.pallas import tpu as pltpu

_LANE = 128
_SUB = 8
_TILE_PX = _SUB * _LANE          # 1024-pixel alignment -> (8,128)-aligned slabs
_F32_TMP_CH = 12                 # ~f32 temporaries per pixel in the HSV kernels


def _vmem_caps():
    """Generation-aware VMEM working-set budget and scoped limit."""
    phys = 64 * 1024 * 1024      # v7x per-TensorCore VMEM (smallest of v5e/v6e/v7x)
    try:
        info = pltpu.get_tpu_info()
        phys = int(getattr(info, "vmem_capacity_bytes", phys))
    except Exception:
        pass
    limit = min((phys * 3) // 4, 96 * 1024 * 1024)
    budget = (limit * 2) // 3
    return budget, limit


_VMEM_BUDGET, _VMEM_LIMIT = _vmem_caps()


# --------------------------------- kernel math ---------------------------------
def _hsv_core(x, need_v=True):
    """x: (Bt, 3, Rt, 128) f32 -> (h, s, v), each (Bt, Rt, 128)."""
    r, g, b = x[:, 0], x[:, 1], x[:, 2]
    mx = jnp.maximum(jnp.maximum(r, g), b)
    mn = jnp.minimum(jnp.minimum(r, g), b)
    diff = mx - mn
    valid = diff > 0.0
    pos = mx > 0.0

    # Keep the mx>0 guard (exact parity with torch even for non-[0,1] inputs).
    s = jnp.where(pos, diff / jnp.where(pos, mx, 1.0), 0.0)

    d_rcp = 1.0 / jnp.where(valid, diff, 1.0)
    hr = (g - b) * d_rcp
    hr = jnp.where(hr < 0.0, hr + 6.0, hr)          # == mod(., 6): |g-b| <= diff when mx==r
    hg = (b - r) * d_rcp + 2.0
    hb = (r - g) * d_rcp + 4.0
    # Same overwrite order as the PyTorch masked assignments: r, then g, then b wins.
    h = jnp.where(mx == r, hr, 0.0)
    h = jnp.where(mx == g, hg, h)
    h = jnp.where(mx == b, hb, h)
    h = jnp.where(valid, h, 0.0) * (1.0 / 6.0)
    return h, s, (mx if need_v else None)


def _l2scale(t):
    """Scale so the pixel (last two axes) L2 norm is 1; == F.normalize(..., eps=1e-12)."""
    ss = jnp.sum(t * t, axis=(-2, -1), keepdims=True)
    return t * lax.rsqrt(jnp.maximum(ss, 1e-24))


# ------------------------------ single-pass kernels ------------------------------
def _hsv_kernel(x_ref, color_ref, bright_ref):
    # x: (Bt,3,R,128) -> color (Bt,2,R,128), brightness (Bt,1,R,128); all L2-normalized.
    x = x_ref[...].astype(jnp.float32)
    h, s, v = _hsv_core(x)
    cd = color_ref.dtype
    color_ref[:, 0] = _l2scale(h).astype(cd)
    color_ref[:, 1] = _l2scale(s).astype(cd)
    bright_ref[:, 0] = _l2scale(v).astype(bright_ref.dtype)


def _hsv_color_kernel(x_ref, color_ref):
    # Brightness comes from the extra modality; V is never normalized / written.
    x = x_ref[...].astype(jnp.float32)
    h, s, _ = _hsv_core(x, need_v=False)
    cd = color_ref.dtype
    color_ref[:, 0] = _l2scale(h).astype(cd)
    color_ref[:, 1] = _l2scale(s).astype(cd)


def _hsv_extra_kernel(x_ref, e_ref, color_ref, bright_ref):
    # Fused: HS color from RGB + L2-normalized extra modality, one launch.
    x = x_ref[...].astype(jnp.float32)
    h, s, _ = _hsv_core(x, need_v=False)
    cd = color_ref.dtype
    color_ref[:, 0] = _l2scale(h).astype(cd)
    color_ref[:, 1] = _l2scale(s).astype(cd)
    bright_ref[...] = _l2scale(e_ref[...].astype(jnp.float32)).astype(bright_ref.dtype)


def _l2_normalize_kernel(x_ref, o_ref):
    o_ref[...] = _l2scale(x_ref[...].astype(jnp.float32)).astype(o_ref.dtype)


# ---------------------- two-pass (large-frame) kernels ----------------------
def _hsv_ss_kernel(x_ref, ss_ref):
    # Pass 1: accumulate per-(batch, channel) lane-partial sums of squares of H, S, V.
    # x: (Bt,3,Rt,128); ss: (Bt,3,128) f32, resident across the pixel-tile grid axis.
    @pl.when(pl.program_id(1) == 0)
    def _():
        ss_ref[...] = jnp.zeros_like(ss_ref)

    x = x_ref[...].astype(jnp.float32)
    h, s, v = _hsv_core(x)
    ss_ref[:, 0, :] += jnp.sum(h * h, axis=1)
    ss_ref[:, 1, :] += jnp.sum(s * s, axis=1)
    ss_ref[:, 2, :] += jnp.sum(v * v, axis=1)


def _hsv_scale_body(ss_ref, x_ref, color_ref, bright_ref):
    # Pass 2: recompute HSV from RGB (cheaper than HBM write + readback) and rescale.
    inv = lax.rsqrt(jnp.maximum(jnp.sum(ss_ref[...], axis=-1, keepdims=True), 1e-24))
    x = x_ref[...].astype(jnp.float32)
    need_v = bright_ref is not None
    h, s, v = _hsv_core(x, need_v=need_v)
    cd = color_ref.dtype
    color_ref[:, 0] = (h * inv[:, 0:1, :]).astype(cd)
    color_ref[:, 1] = (s * inv[:, 1:2, :]).astype(cd)
    if need_v:
        bright_ref[:, 0] = (v * inv[:, 2:3, :]).astype(bright_ref.dtype)


def _hsv_scale_kernel(ss_ref, x_ref, color_ref, bright_ref):
    _hsv_scale_body(ss_ref, x_ref, color_ref, bright_ref)


def _hsv_scale_color_kernel(ss_ref, x_ref, color_ref):
    _hsv_scale_body(ss_ref, x_ref, color_ref, None)


def _ss_kernel(x_ref, ss_ref):
    # Generic pass 1: per-(batch, channel) lane-partial sum of squares.
    @pl.when(pl.program_id(1) == 0)
    def _():
        ss_ref[...] = jnp.zeros_like(ss_ref)

    x = x_ref[...].astype(jnp.float32)
    ss_ref[...] += jnp.sum(x * x, axis=2)


def _scale_kernel(ss_ref, x_ref, o_ref):
    inv = lax.rsqrt(jnp.maximum(jnp.sum(ss_ref[...], axis=-1, keepdims=True), 1e-24))
    o_ref[...] = (x_ref[...].astype(jnp.float32) * inv[:, :, :, None]).astype(o_ref.dtype)


# --------------------------------- host helpers ---------------------------------
def _prep(x, tile_px=_TILE_PX):
    """(B,C,H,W) -> (B,C,R,128), pixel axis zero-padded to a multiple of tile_px."""
    B, C, H, W = x.shape
    P = H * W
    P_pad = pl.cdiv(P, tile_px) * tile_px
    xf = x.reshape(B, C, P)
    if P_pad != P:
        xf = jnp.pad(xf, ((0, 0), (0, 0), (0, P_pad - P)))
    return xf.reshape(B, C, P_pad // _LANE, _LANE), P


def _unprep(y, P, H, W):
    B, C = y.shape[:2]
    yf = y.reshape(B, C, -1)
    if yf.shape[-1] != P:
        yf = yf[:, :, :P]
    return yf.reshape(B, C, H, W)


def _largest_divisor_leq(n, cap):
    cap = int(max(1, min(cap, n)))
    for d in range(cap, 0, -1):
        if n % d == 0:
            return d
    return 1


def _pick_bt(B, per_elem_bytes, min_grid=8):
    """Batch elements per grid step: a divisor of B (no batch pad / output slice),
    bounded by the VMEM budget and kept small enough to leave >= min_grid pipelined
    grid steps whenever the batch allows it."""
    cap_vmem = max(1, _VMEM_BUDGET // max(int(per_elem_bytes), 1))
    cap_grid = max(1, B // min(min_grid, B))
    return _largest_divisor_leq(B, min(cap_vmem, cap_grid))


# --------------------------------- pallas wrappers ---------------------------------
def _extract_hsv(rgb, *, compute_brightness):
    """Color (HS) + optional brightness (V), each L2-normalized over the pixels."""
    B, C, H, W = rgb.shape
    assert C == 3, "RGB input must have 3 channels"
    it = jnp.dtype(rgb.dtype).itemsize
    out_ch = 3 if compute_brightness else 2
    R_min = pl.cdiv(H * W, _TILE_PX) * _SUB
    elem_bytes = R_min * _LANE * (2 * (3 + out_ch) * it + _F32_TMP_CH * 4)
    if elem_bytes > _VMEM_BUDGET:
        return _extract_hsv_two_pass(rgb, compute_brightness=compute_brightness)

    x4, P = _prep(rgb)
    R = x4.shape[2]
    Bt = _pick_bt(B, elem_bytes)
    grid = (B // Bt,)
    n_px = B * R * _LANE
    cost = pl.CostEstimate(flops=int(40 * n_px), transcendentals=int(3 * B),
                           bytes_accessed=int((3 + out_ch) * n_px * it))

    in_specs = [pl.BlockSpec((Bt, 3, R, _LANE), lambda i: (i, 0, 0, 0))]
    if compute_brightness:
        kernel = _hsv_kernel
        out_shape = (jax.ShapeDtypeStruct((B, 2, R, _LANE), rgb.dtype),
                     jax.ShapeDtypeStruct((B, 1, R, _LANE), rgb.dtype))
        out_specs = [pl.BlockSpec((Bt, 2, R, _LANE), lambda i: (i, 0, 0, 0)),
                     pl.BlockSpec((Bt, 1, R, _LANE), lambda i: (i, 0, 0, 0))]
    else:
        kernel = _hsv_color_kernel
        out_shape = jax.ShapeDtypeStruct((B, 2, R, _LANE), rgb.dtype)
        out_specs = pl.BlockSpec((Bt, 2, R, _LANE), lambda i: (i, 0, 0, 0))

    result = pl.pallas_call(
        kernel,
        out_shape=out_shape,
        grid_spec=pltpu.PrefetchScalarGridSpec(
            num_scalar_prefetch=0, grid=grid, in_specs=in_specs, out_specs=out_specs),
        compiler_params=pltpu.CompilerParams(
            dimension_semantics=("parallel",), vmem_limit_bytes=_VMEM_LIMIT),
        cost_estimate=cost,
    )(x4)

    if compute_brightness:
        color4, bright4 = result
        return _unprep(color4, P, H, W), _unprep(bright4, P, H, W)
    return _unprep(result, P, H, W), None


def _extract_hsv_fused(rgb, extra):
    """One launch: HS color from RGB + L2-normalized extra modality (same B, H, W)."""
    B, _, H, W = rgb.shape
    Ce = extra.shape[1]
    it = jnp.dtype(rgb.dtype).itemsize
    ie = jnp.dtype(extra.dtype).itemsize
    x4, P = _prep(rgb)
    e4, _ = _prep(extra)
    R = x4.shape[2]
    elem_bytes = R * _LANE * (2 * (5 * it + 2 * Ce * ie) + (_F32_TMP_CH + 2 * Ce) * 4)
    Bt = _pick_bt(B, elem_bytes)
    grid = (B // Bt,)
    n_px = B * R * _LANE
    cost = pl.CostEstimate(flops=int((40 + 3 * Ce) * n_px),
                           transcendentals=int((2 + Ce) * B),
                           bytes_accessed=int(n_px * (5 * it + 2 * Ce * ie)))

    color4, bright4 = pl.pallas_call(
        _hsv_extra_kernel,
        out_shape=(jax.ShapeDtypeStruct((B, 2, R, _LANE), rgb.dtype),
                   jax.ShapeDtypeStruct((B, Ce, R, _LANE), extra.dtype)),
        grid_spec=pltpu.PrefetchScalarGridSpec(
            num_scalar_prefetch=0, grid=grid,
            in_specs=[pl.BlockSpec((Bt, 3, R, _LANE), lambda i: (i, 0, 0, 0)),
                      pl.BlockSpec((Bt, Ce, R, _LANE), lambda i: (i, 0, 0, 0))],
            out_specs=[pl.BlockSpec((Bt, 2, R, _LANE), lambda i: (i, 0, 0, 0)),
                       pl.BlockSpec((Bt, Ce, R, _LANE), lambda i: (i, 0, 0, 0))]),
        compiler_params=pltpu.CompilerParams(
            dimension_semantics=("parallel",), vmem_limit_bytes=_VMEM_LIMIT),
        cost_estimate=cost,
    )(x4, e4)
    return _unprep(color4, P, H, W), _unprep(bright4, P, H, W)


def _extract_hsv_two_pass(rgb, *, compute_brightness, rt=None):
    """Large-frame path: pixel axis is tiled; pass 1 accumulates per-(b,c) sums of
    squares, pass 2 recomputes HSV from RGB and rescales."""
    B, C, H, W = rgb.shape
    assert C == 3, "RGB input must have 3 channels"
    it = jnp.dtype(rgb.dtype).itemsize
    out_ch = 3 if compute_brightness else 2
    if rt is None:
        bytes_per_row = _LANE * (2 * (3 + out_ch) * it + _F32_TMP_CH * 4)
        rt = max(_SUB, (_VMEM_BUDGET // bytes_per_row) // _SUB * _SUB)
        rt = min(rt, pl.cdiv(H * W, _TILE_PX) * _SUB)
    x4, P = _prep(rgb, tile_px=rt * _LANE)
    R = x4.shape[2]
    grid = (B, R // rt)

    x_spec = pl.BlockSpec((1, 3, rt, _LANE), lambda i, r: (i, 0, r, 0))
    ss_spec = pl.BlockSpec((1, 3, _LANE), lambda i, r: (i, 0, 0))
    params = pltpu.CompilerParams(dimension_semantics=("parallel", "arbitrary"),
                                  vmem_limit_bytes=_VMEM_LIMIT)

    ss = pl.pallas_call(
        _hsv_ss_kernel,
        out_shape=jax.ShapeDtypeStruct((B, 3, _LANE), jnp.float32),
        grid_spec=pltpu.PrefetchScalarGridSpec(
            num_scalar_prefetch=0, grid=grid, in_specs=[x_spec], out_specs=ss_spec),
        compiler_params=params,
    )(x4)

    if compute_brightness:
        kernel = _hsv_scale_kernel
        out_shape = (jax.ShapeDtypeStruct((B, 2, R, _LANE), rgb.dtype),
                     jax.ShapeDtypeStruct((B, 1, R, _LANE), rgb.dtype))
        out_specs = [pl.BlockSpec((1, 2, rt, _LANE), lambda i, r: (i, 0, r, 0)),
                     pl.BlockSpec((1, 1, rt, _LANE), lambda i, r: (i, 0, r, 0))]
    else:
        kernel = _hsv_scale_color_kernel
        out_shape = jax.ShapeDtypeStruct((B, 2, R, _LANE), rgb.dtype)
        out_specs = pl.BlockSpec((1, 2, rt, _LANE), lambda i, r: (i, 0, r, 0))

    result = pl.pallas_call(
        kernel,
        out_shape=out_shape,
        grid_spec=pltpu.PrefetchScalarGridSpec(
            num_scalar_prefetch=0, grid=grid, in_specs=[ss_spec, x_spec],
            out_specs=out_specs),
        compiler_params=params,
    )(ss, x4)

    if compute_brightness:
        color4, bright4 = result
        return _unprep(color4, P, H, W), _unprep(bright4, P, H, W)
    return _unprep(result, P, H, W), None


def _normalize_modality(x, rt=None):
    """Per-(batch, channel) L2 normalization over pixels: F.normalize(x.flatten(2), dim=2)."""
    B, C, H, W = x.shape
    it = jnp.dtype(x.dtype).itemsize
    R_min = pl.cdiv(H * W, _TILE_PX) * _SUB
    elem_bytes = R_min * _LANE * C * (4 * it + 3 * 4)

    if rt is None and elem_bytes <= _VMEM_BUDGET:
        x4, P = _prep(x)
        R = x4.shape[2]
        Bt = _pick_bt(B, elem_bytes)
        out = pl.pallas_call(
            _l2_normalize_kernel,
            out_shape=jax.ShapeDtypeStruct((B, C, R, _LANE), x.dtype),
            grid_spec=pltpu.PrefetchScalarGridSpec(
                num_scalar_prefetch=0, grid=(B // Bt,),
                in_specs=[pl.BlockSpec((Bt, C, R, _LANE), lambda i: (i, 0, 0, 0))],
                out_specs=pl.BlockSpec((Bt, C, R, _LANE), lambda i: (i, 0, 0, 0))),
            compiler_params=pltpu.CompilerParams(
                dimension_semantics=("parallel",), vmem_limit_bytes=_VMEM_LIMIT),
        )(x4)
        return _unprep(out, P, H, W)

    # Two-pass (large-frame) path.
    if rt is None:
        bytes_per_row = _LANE * C * (4 * it + 3 * 4)
        rt = max(_SUB, (_VMEM_BUDGET // bytes_per_row) // _SUB * _SUB)
        rt = min(rt, R_min)
    x4, P = _prep(x, tile_px=rt * _LANE)
    R = x4.shape[2]
    grid = (B, R // rt)
    x_spec = pl.BlockSpec((1, C, rt, _LANE), lambda i, r: (i, 0, r, 0))
    ss_spec = pl.BlockSpec((1, C, _LANE), lambda i, r: (i, 0, 0))
    params = pltpu.CompilerParams(dimension_semantics=("parallel", "arbitrary"),
                                  vmem_limit_bytes=_VMEM_LIMIT)
    ss = pl.pallas_call(
        _ss_kernel, out_shape=jax.ShapeDtypeStruct((B, C, _LANE), jnp.float32),
        grid_spec=pltpu.PrefetchScalarGridSpec(
            num_scalar_prefetch=0, grid=grid, in_specs=[x_spec], out_specs=ss_spec),
        compiler_params=params,
    )(x4)
    out = pl.pallas_call(
        _scale_kernel, out_shape=jax.ShapeDtypeStruct((B, C, R, _LANE), x.dtype),
        grid_spec=pltpu.PrefetchScalarGridSpec(
            num_scalar_prefetch=0, grid=grid, in_specs=[ss_spec, x_spec],
            out_specs=x_spec),
        compiler_params=params,
    )(ss, x4)
    return _unprep(out, P, H, W)


def multimodal_feature_extractor(rgb, additional_modality=None):
    """MultiModalFeatureExtractor(rgb_method='hsv', normalize=True).forward"""
    if additional_modality is None:
        return _extract_hsv(rgb, compute_brightness=True)

    B, _, H, W = rgb.shape
    e = additional_modality
    it = jnp.dtype(rgb.dtype).itemsize
    ie = jnp.dtype(e.dtype).itemsize
    same_layout = e.ndim == 4 and e.shape[0] == B and e.shape[2] == H and e.shape[3] == W
    if same_layout:
        Ce = e.shape[1]
        R_min = pl.cdiv(H * W, _TILE_PX) * _SUB
        fused_bytes = R_min * _LANE * (2 * (5 * it + 2 * Ce * ie)
                                       + (_F32_TMP_CH + 2 * Ce) * 4)
        if fused_bytes <= _VMEM_BUDGET:
            return _extract_hsv_fused(rgb, e)

    color, _ = _extract_hsv(rgb, compute_brightness=False)
    return color, _normalize_modality(e)


# ------------------------- pure-JAX reference for verification -------------------------
def _ref_normalize(t):
    B, C, H, W = t.shape
    tf = t.reshape(B, C, H * W)
    n = jnp.sqrt(jnp.sum(tf * tf, axis=2, keepdims=True))
    return (tf / jnp.maximum(n, 1e-12)).reshape(t.shape)


def _ref_forward(rgb, additional_modality=None):
    r, g, b = rgb[:, 0], rgb[:, 1], rgb[:, 2]
    mx = jnp.max(rgb, axis=1)
    mn = jnp.min(rgb, axis=1)
    diff = mx - mn
    v = mx
    s = jnp.where(mx > 0, diff / jnp.where(mx > 0, mx, 1.0), 0.0)
    d_safe = jnp.where(diff > 0, diff, 1.0)
    h = jnp.zeros_like(mx)
    h = jnp.where((mx == r) & (diff > 0), jnp.mod((g - b) / d_safe, 6.0), h)
    h = jnp.where((mx == g) & (diff > 0), (b - r) / d_safe + 2.0, h)
    h = jnp.where((mx == b) & (diff > 0), (r - g) / d_safe + 4.0, h)
    h = h / 6.0
    color = _ref_normalize(jnp.stack([h, s], axis=1))
    if additional_modality is not None:
        bright = _ref_normalize(additional_modality)
    else:
        bright = _ref_normalize(v[:, None])
    return color, bright


if __name__ == "__main__":
    key = jax.random.PRNGKey(0)
    k1, k2, k3, k4 = jax.random.split(key, 4)
    B, H, W = 2, 16, 16
    rgb = jax.random.uniform(k1, (B, 3, H, W), dtype=jnp.float32)
    extra = jax.random.uniform(k2, (B, 1, H, W), dtype=jnp.float32)

    # 1) no additional modality: fused color + RGB brightness (single-pass kernel)
    color, brightness = multimodal_feature_extractor(rgb, None)
    jax.block_until_ready((color, brightness))
    ref_c, ref_b = _ref_forward(rgb, None)
    assert color.shape == (B, 2, H, W) and brightness.shape == (B, 1, H, W)
    assert jnp.allclose(color, ref_c, atol=1e-5), "color mismatch"
    assert jnp.allclose(brightness, ref_b, atol=1e-5), "brightness mismatch"

    # 2) with additional modality (same layout): fused single-pass kernel
    color2, brightness2 = multimodal_feature_extractor(rgb, extra)
    jax.block_until_ready((color2, brightness2))
    ref_c2, ref_b2 = _ref_forward(rgb, extra)
    assert jnp.allclose(color2, ref_c2, atol=1e-5), "color mismatch (extra)"
    assert jnp.allclose(brightness2, ref_b2, atol=1e-5), "brightness mismatch (extra)"

    # 3) extra modality with a different spatial size: color-only + separate normalize kernels
    extra_small = jax.random.uniform(k3, (B, 1, 8, 8), dtype=jnp.float32)
    color3, brightness3 = multimodal_feature_extractor(rgb, extra_small)
    jax.block_until_ready((color3, brightness3))
    assert jnp.allclose(color3, ref_c, atol=1e-5), "color mismatch (separate)"
    assert jnp.allclose(brightness3, _ref_normalize(extra_small), atol=1e-5), \
        "brightness mismatch (separate)"

    # 4) large-frame (two-pass) path, forced with a small pixel tile so the reduction
    #    axis has several grid steps.
    rgb_big = jax.random.uniform(k4, (2, 3, 64, 64), dtype=jnp.float32)
    extra_big = jax.random.uniform(k2, (2, 1, 64, 64), dtype=jnp.float32)
    color4, brightness4 = _extract_hsv_two_pass(rgb_big, compute_brightness=True, rt=8)
    bright4e = _normalize_modality(extra_big, rt=8)
    jax.block_until_ready((color4, brightness4, bright4e))
    ref_c4, ref_b4 = _ref_forward(rgb_big, None)
    assert jnp.allclose(color4, ref_c4, atol=1e-5), "color mismatch (two-pass)"
    assert jnp.allclose(brightness4, ref_b4, atol=1e-5), "brightness mismatch (two-pass)"
    assert jnp.allclose(bright4e, _ref_normalize(extra_big), atol=1e-5), \
        "modality mismatch (two-pass)"

    print("KERNEL_OK")
</pallas_src>

<mosaic_0001>
module attributes {stable_mosaic.version = 11 : i64} {
  func.func @_hsv_kernel(%arg0: i32, %arg1: memref<1x3x8x128xf32, #tpu.memory_space<vmem>>, %arg2: memref<1x2x8x128xf32, #tpu.memory_space<vmem>>, %arg3: memref<1x1x8x128xf32, #tpu.memory_space<vmem>>) attributes {dimension_semantics = [#tpu.dimension_semantics<parallel>], iteration_bounds = array<i64: 2>, scalar_prefetch = 0 : i64, scratch_operands = 0 : i64, tpu.core_type = #tpu.core_type<tc>, window_params = [{transform_indices = @transform_0, window_bounds = array<i64: 1, 3, 8, 128>}, {transform_indices = @transform_1, window_bounds = array<i64: 1, 2, 8, 128>}, {transform_indices = @transform_2, window_bounds = array<i64: 1, 1, 8, 128>}]} {
    %c0 = arith.constant 0 : index
    %c0_0 = arith.constant 0 : index
    %c0_1 = arith.constant 0 : index
    %c0_2 = arith.constant 0 : index
    %0 = vector.load %arg1[%c0, %c0_0, %c0_1, %c0_2] : memref<1x3x8x128xf32, #tpu.memory_space<vmem>>, vector<1x3x8x128xf32>
    %1 = vector.extract_strided_slice %0 {offsets = [0, 0, 0, 0], sizes = [1, 1, 8, 128], strides = [1, 1, 1, 1]} : vector<1x3x8x128xf32> to vector<1x1x8x128xf32>
    %2 = vector.shape_cast %1 : vector<1x1x8x128xf32> to vector<1x8x128xf32>
    %3 = vector.extract_strided_slice %0 {offsets = [0, 1, 0, 0], sizes = [1, 1, 8, 128], strides = [1, 1, 1, 1]} : vector<1x3x8x128xf32> to vector<1x1x8x128xf32>
    %4 = vector.shape_cast %3 : vector<1x1x8x128xf32> to vector<1x8x128xf32>
    %5 = vector.extract_strided_slice %0 {offsets = [0, 2, 0, 0], sizes = [1, 1, 8, 128], strides = [1, 1, 1, 1]} : vector<1x3x8x128xf32> to vector<1x1x8x128xf32>
    %6 = vector.shape_cast %5 : vector<1x1x8x128xf32> to vector<1x8x128xf32>
    %7 = arith.maximumf %2, %4 : vector<1x8x128xf32>
    %8 = arith.maximumf %7, %6 : vector<1x8x128xf32>
    %9 = arith.minimumf %2, %4 : vector<1x8x128xf32>
    %10 = arith.minimumf %9, %6 : vector<1x8x128xf32>
    %11 = arith.subf %8, %10 : vector<1x8x128xf32>
    %cst = arith.constant 0.000000e+00 : f32
    %12 = vector.broadcast %cst : f32 to vector<1x8x128xf32>
    %13 = arith.cmpf ogt, %11, %12 : vector<1x8x128xf32>
    %cst_3 = arith.constant 0.000000e+00 : f32
    %14 = vector.broadcast %cst_3 : f32 to vector<1x8x128xf32>
    %15 = arith.cmpf ogt, %8, %14 : vector<1x8x128xf32>
    %cst_4 = arith.constant 1.000000e+00 : f32
    %16 = vector.broadcast %cst_4 : f32 to vector<1x8x128xf32>
    %17 = arith.select %15, %8, %16 : vector<1x8x128xi1>, vector<1x8x128xf32>
    %18 = arith.divf %11, %17 : vector<1x8x128xf32>
    %cst_5 = arith.constant 0.000000e+00 : f32
    %19 = vector.broadcast %cst_5 : f32 to vector<1x8x128xf32>
    %20 = arith.select %15, %18, %19 : vector<1x8x128xi1>, vector<1x8x128xf32>
    %cst_6 = arith.constant 1.000000e+00 : f32
    %21 = vector.broadcast %cst_6 : f32 to vector<1x8x128xf32>
    %22 = arith.select %13, %11, %21 : vector<1x8x128xi1>, vector<1x8x128xf32>
    %cst_7 = arith.constant 1.000000e+00 : f32
    %23 = vector.broadcast %cst_7 : f32 to vector<1x8x128xf32>
    %24 = arith.divf %23, %22 : vector<1x8x128xf32>
    %25 = arith.subf %4, %6 : vector<1x8x128xf32>
    %26 = arith.mulf %25, %24 : vector<1x8x128xf32>
    %cst_8 = arith.constant 0.000000e+00 : f32
    %27 = vector.broadcast %cst_8 : f32 to vector<1x8x128xf32>
    %28 = arith.cmpf olt, %26, %27 : vector<1x8x128xf32>
    %cst_9 = arith.constant 6.000000e+00 : f32
    %29 = vector.broadcast %cst_9 : f32 to vector<1x8x128xf32>
    %30 = arith.addf %26, %29 : vector<1x8x128xf32>
    %31 = arith.select %28, %30, %26 : vector<1x8x128xi1>, vector<1x8x128xf32>
    %32 = arith.subf %6, %2 : vector<1x8x128xf32>
    %33 = arith.mulf %32, %24 : vector<1x8x128xf32>
    %cst_10 = arith.constant 2.000000e+00 : f32
    %34 = vector.broadcast %cst_10 : f32 to vector<1x8x128xf32>
    %35 = arith.addf %33, %34 : vector<1x8x128xf32>
    %36 = arith.subf %2, %4 : vector<1x8x128xf32>
    %37 = arith.mulf %36, %24 : vector<1x8x128xf32>
    %cst_11 = arith.constant 4.000000e+00 : f32
    %38 = vector.broadcast %cst_11 : f32 to vector<1x8x128xf32>
    %39 = arith.addf %37, %38 : vector<1x8x128xf32>
    %40 = arith.cmpf oeq, %8, %2 : vector<1x8x128xf32>
    %cst_12 = arith.constant 0.000000e+00 : f32
    %41 = vector.broadcast %cst_12 : f32 to vector<1x8x128xf32>
    %42 = arith.select %40, %31, %41 : vector<1x8x128xi1>, vector<1x8x128xf32>
    %43 = arith.cmpf oeq, %8, %4 : vector<1x8x128xf32>
    %44 = arith.select %43, %35, %42 : vector<1x8x128xi1>, vector<1x8x128xf32>
    %45 = arith.cmpf oeq, %8, %6 : vector<1x8x128xf32>
    %46 = arith.select %45, %39, %44 : vector<1x8x128xi1>, vector<1x8x128xf32>
    %cst_13 = arith.constant 0.000000e+00 : f32
    %47 = vector.broadcast %cst_13 : f32 to vector<1x8x128xf32>
    %48 = arith.select %13, %46, %47 : vector<1x8x128xi1>, vector<1x8x128xf32>
    %cst_14 = arith.constant 0.166666672 : f32
    %49 = vector.broadcast %cst_14 : f32 to vector<1x8x128xf32>
    %50 = arith.mulf %48, %49 : vector<1x8x128xf32>
    %51 = arith.mulf %50, %50 : vector<1x8x128xf32>
    %cst_15 = arith.constant dense<0.000000e+00> : vector<1xf32>
    %52 = vector.multi_reduction <add>, %51, %cst_15 [1, 2] : vector<1x8x128xf32> to vector<1xf32>
    %53 = vector.shape_cast %52 : vector<1xf32> to vector<1x1x1xf32>
    %cst_16 = arith.constant 1.000000e-24 : f32
    %54 = vector.broadcast %cst_16 : f32 to vector<1x1x1xf32>
    %55 = arith.maximumf %53, %54 : vector<1x1x1xf32>
    %56 = math.rsqrt %55 : vector<1x1x1xf32>
    %57 = vector.broadcast %56 : vector<1x1x1xf32> to vector<1x8x128xf32>
    %58 = arith.mulf %50, %57 : vector<1x8x128xf32>
    %c0_17 = arith.constant 0 : index
    %c0_18 = arith.constant 0 : index
    %c0_19 = arith.constant 0 : index
    %c0_20 = arith.constant 0 : index
    %59 = vector.load %arg2[%c0_17, %c0_18, %c0_19, %c0_20] : memref<1x2x8x128xf32, #tpu.memory_space<vmem>>, vector<1x1x8x128xf32>
    %60 = vector.shape_cast %59 : vector<1x1x8x128xf32> to vector<1x8x128xf32>
    %61 = vector.shape_cast %58 : vector<1x8x128xf32> to vector<1x1x8x128xf32>
    tpu.vector_store %arg2[%c0_17, %c0_18, %c0_19, %c0_20], %61 {strides = array<i32>} : memref<1x2x8x128xf32, #tpu.memory_space<vmem>>, vector<1x1x8x128xf32>,
    %62 = arith.mulf %20, %20 : vector<1x8x128xf32>
    %cst_21 = arith.constant dense<0.000000e+00> : vector<1xf32>
    %63 = vector.multi_reduction <add>, %62, %cst_21 [1, 2] : vector<1x8x128xf32> to vector<1xf32>
    %64 = vector.shape_cast %63 : vector<1xf32> to vector<1x1x1xf32>
    %cst_22 = arith.constant 1.000000e-24 : f32
    %65 = vector.broadcast %cst_22 : f32 to vector<1x1x1xf32>
    %66 = arith.maximumf %64, %65 : vector<1x1x1xf32>
    %67 = math.rsqrt %66 : vector<1x1x1xf32>
    %68 = vector.broadcast %67 : vector<1x1x1xf32> to vector<1x8x128xf32>
    %69 = arith.mulf %20, %68 : vector<1x8x128xf32>
    %c0_23 = arith.constant 0 : index
    %c1 = arith.constant 1 : index
    %c0_24 = arith.constant 0 : index
    %c0_25 = arith.constant 0 : index
    %70 = vector.load %arg2[%c0_23, %c1, %c0_24, %c0_25] : memref<1x2x8x128xf32, #tpu.memory_space<vmem>>, vector<1x1x8x128xf32>
    %71 = vector.shape_cast %70 : vector<1x1x8x128xf32> to vector<1x8x128xf32>
    %72 = vector.shape_cast %69 : vector<1x8x128xf32> to vector<1x1x8x128xf32>
    tpu.vector_store %arg2[%c0_23, %c1, %c0_24, %c0_25], %72 {strides = array<i32>} : memref<1x2x8x128xf32, #tpu.memory_space<vmem>>, vector<1x1x8x128xf32>,
    %73 = arith.mulf %8, %8 : vector<1x8x128xf32>
    %cst_26 = arith.constant dense<0.000000e+00> : vector<1xf32>
    %74 = vector.multi_reduction <add>, %73, %cst_26 [1, 2] : vector<1x8x128xf32> to vector<1xf32>
    %75 = vector.shape_cast %74 : vector<1xf32> to vector<1x1x1xf32>
    %cst_27 = arith.constant 1.000000e-24 : f32
    %76 = vector.broadcast %cst_27 : f32 to vector<1x1x1xf32>
    %77 = arith.maximumf %75, %76 : vector<1x1x1xf32>
    %78 = math.rsqrt %77 : vector<1x1x1xf32>
    %79 = vector.broadcast %78 : vector<1x1x1xf32> to vector<1x8x128xf32>
    %80 = arith.mulf %8, %79 : vector<1x8x128xf32>
    %c0_28 = arith.constant 0 : index
    %c0_29 = arith.constant 0 : index
    %c0_30 = arith.constant 0 : index
    %c0_31 = arith.constant 0 : index
    %81 = vector.load %arg3[%c0_28, %c0_29, %c0_30, %c0_31] : memref<1x1x8x128xf32, #tpu.memory_space<vmem>>, vector<1x1x8x128xf32>
    %82 = vector.shape_cast %81 : vector<1x1x8x128xf32> to vector<1x8x128xf32>
    %83 = vector.shape_cast %80 : vector<1x8x128xf32> to vector<1x1x8x128xf32>
    tpu.vector_store %arg3[%c0_28, %c0_29, %c0_30, %c0_31], %83 {strides = array<i32>} : memref<1x1x8x128xf32, #tpu.memory_space<vmem>>, vector<1x1x8x128xf32>,
    return
  }
  func.func @transform_0(%arg0: i32) -> (i32, i32, i32, i32) {
    %c0_i32 = arith.constant 0 : i32
    %c0_i32_0 = arith.constant 0 : i32
    %c0_i32_1 = arith.constant 0 : i32
    %c0_i32_2 = arith.constant 0 : i32
    return %arg0, %c0_i32, %c0_i32_0, %c0_i32_1 : i32, i32, i32, i32
  }
  func.func @transform_1(%arg0: i32) -> (i32, i32, i32, i32) {
    %c0_i32 = arith.constant 0 : i32
    %c0_i32_0 = arith.constant 0 : i32
    %c0_i32_1 = arith.constant 0 : i32
    %c0_i32_2 = arith.constant 0 : i32
    return %arg0, %c0_i32, %c0_i32_0, %c0_i32_1 : i32, i32, i32, i32
  }
  func.func @transform_2(%arg0: i32) -> (i32, i32, i32, i32) {
    %c0_i32 = arith.constant 0 : i32
    %c0_i32_0 = arith.constant 0 : i32
    %c0_i32_1 = arith.constant 0 : i32
    %c0_i32_2 = arith.constant 0 : i32
    return %arg0, %c0_i32, %c0_i32_0, %c0_i32_1 : i32, i32, i32, i32
  }
}

</mosaic_0001>

<llo_original>
// kernel: tpu_custom_call.1
$region0: #{tpu_custom_call.1}
  #allocation0 [shape = 'u32[]', space=smem, size = 0x4, offset = 0x4, fixed_abs, tag = 'smem constant byte address 0x4 - core index']
  #allocation1 [shape = 'u32[144,128]{1,0:T(1,128)}', space=vmem, size = 0x12000, scoped, tag = 'internal scratch']
  %s0 = inlined_call_operand.hbm [shape: f32[2,3,8,128], index: 0, kind: input, shape index: {}]
  %s1 = inlined_call_operand.hbm [shape: f32[2,2,8,128], index: 1, kind: output, shape index: {0}]
  %s2 = inlined_call_operand.hbm [shape: f32[2,1,8,128], index: 2, kind: output, shape index: {1}]
  %3 = xla_tuple %s1, %s2
  %s4 = sld [smem:[#allocation0]]
  $region49: #{tpu_custom_call.1} parent=0
    _
  %s6 = ssub.s32 1, %s4
  %s7 = scalar_select 0, %s6, %s4
  $region1: #{tpu_custom_call.1} parent=0
    #allocation2 [shape = 'u8[24576]{0}', space=vmem, size = 0x6000, scoped, tag = 'input window, operand 0']
    #allocation3 [shape = 's32[2]{0}', space=sflag, size = 0x8, scoped, tag = 'scoped memory for tpu_custom_call.1']
    #allocation4 [shape = 's32[2]{0}', space=sflag, size = 0x8, scoped, tag = 'scoped memory for tpu_custom_call.1']
    #allocation5 [shape = 'u8[16384]{0}', space=vmem, size = 0x4000, scoped, tag = 'output window, operand 0']
    #allocation6 [shape = 'u8[8192]{0}', space=vmem, size = 0x2000, scoped, tag = 'output window, operand 1']
    #allocation7 [shape = 's32[2]{0}', space=sflag, size = 0x8, scoped, tag = 'scoped memory for tpu_custom_call.1']
    %8 = vsyncpa [#allocation3], 0
    %s9 = scalar_lea.sflag [#allocation3], 1
    %10 = vsyncpa %s9, 0
    %11 = vsyncpa [#allocation4], 0
    %s12 = scalar_lea.sflag [#allocation4], 1
    %13 = vsyncpa %s12, 0
    %14 = vsyncpa [#allocation7], 0
    %s15 = scalar_lea.sflag [#allocation7], 1
    %16 = vsyncpa %s15, 0
    loop: start=0, step=1, limit=4
    $region2: #{tpu_custom_call.1} parent=1 // loop_pre_header
      _
    $region3: #{tpu_custom_call.1} parent=1 // loop_header
      %s18 = sphi 0, %s22
      %p19 = scmp.ge.s32.totalorder %s18, 4
      %s28 = sphi 0, %s30
      %s31 = sphi 0, %s28
      %s32 = sphi 0, %s31
      %s48 = sphi 0, %s32
      %s54 = sphi 0, %s56
      %s57 = sphi 0, %s54
      %s58 = sphi 0, %s57
      %s74 = sphi 0, %s58
      %s80 = sphi 0, %s82
      %s83 = sphi 0, %s80
      %s84 = sphi 0, %s83
      %s100 = sphi 0, %s84
    $region4: #{tpu_custom_call.1} parent=1 // loop_header_branch
      %21 = sbr.rel (%p19) target = $region8
    $region5: #{tpu_custom_call.1} parent=1 // loop_body
      %s23 = ssub.s32 %s18, 1
      %s24 = ssub.s32 %s18, 2
      %s25 = sadd.s32 %s18, 1
      %s26 = ssub.s32 %s18, %s25
      %p27 = scmp.eq.s32.totalorder %s26, 0
      %s29 = sadd.s32 %s28, 1
      %s30 = scalar_select %p27, %s28, %s29
      %p33 = pneg %p27
      %p34 = scmp.eq.s32.totalorder %s18, 1
      %p35 = por %p33, %p34
      %p36 = scmp.ne.s32.totalorder %s28, %s31
      %p37 = scmp.eq.s32.totalorder %s18, 0
      %p38 = por %p36, %p37
      %p39 = scmp.ne.s32.totalorder %s28, %s31
      %p40 = scmp.eq.s32.totalorder %s23, 1
      %p41 = por %p39, %p40
      %p42 = scmp.ne.s32.totalorder %s31, %s32
      %p43 = scmp.eq.s32.totalorder %s23, 0
      %p44 = por %p42, %p43
      %p45 = scmp.ne.s32.totalorder %s31, %s32
      %p46 = scmp.eq.s32.totalorder %s24, 1
      %p47 = por %p45, %p46
      %p49 = scmp.ne.s32.totalorder %s32, %s48
      %p50 = scmp.eq.s32.totalorder %s24, 0
      %p51 = por %p49, %p50
      %s52 = ssub.s32 %s18, %s25
      %p53 = scmp.eq.s32.totalorder %s52, 0
      %s55 = sadd.s32 %s54, 1
      %s56 = scalar_select %p53, %s54, %s55
      %p59 = pneg %p53
      %p60 = scmp.eq.s32.totalorder %s18, 1
      %p61 = por %p59, %p60
      %p62 = scmp.ne.s32.totalorder %s54, %s57
      %p63 = scmp.eq.s32.totalorder %s18, 0
      %p64 = por %p62, %p63
      %p65 = scmp.ne.s32.totalorder %s54, %s57
      %p66 = scmp.eq.s32.totalorder %s23, 1
      %p67 = por %p65, %p66
      %p68 = scmp.ne.s32.totalorder %s57, %s58
      %p69 = scmp.eq.s32.totalorder %s23, 0
      %p70 = por %p68, %p69
      %p71 = scmp.ne.s32.totalorder %s57, %s58
      %p72 = scmp.eq.s32.totalorder %s24, 1
      %p73 = por %p71, %p72
      %p75 = scmp.ne.s32.totalorder %s58, %s74
      %p76 = scmp.eq.s32.totalorder %s24, 0
      %p77 = por %p75, %p76
      %s78 = ssub.s32 %s18, %s25
      %p79 = scmp.eq.s32.totalorder %s78, 0
      %s81 = sadd.s32 %s80, 1
      %s82 = scalar_select %p79, %s80, %s81
      %p85 = pneg %p79
      %p86 = scmp.eq.s32.totalorder %s18, 1
      %p87 = por %p85, %p86
      %p88 = scmp.ne.s32.totalorder %s80, %s83
      %p89 = scmp.eq.s32.totalorder %s18, 0
      %p90 = por %p88, %p89
      %p91 = scmp.ne.s32.totalorder %s80, %s83
      %p92 = scmp.eq.s32.totalorder %s23, 1
      %p93 = por %p91, %p92
      %p94 = scmp.ne.s32.totalorder %s83, %s84
      %p95 = scmp.eq.s32.totalorder %s23, 0
      %p96 = por %p94, %p95
      %p97 = scmp.ne.s32.totalorder %s83, %s84
      %p98 = scmp.eq.s32.totalorder %s24, 1
      %p99 = por %p97, %p98
      %p101 = scmp.ne.s32.totalorder %s84, %s100
      %p102 = scmp.eq.s32.totalorder %s24, 0
      %p103 = por %p101, %p102
      %p104 = scmp.le.s32.totalorder 1, %s18
      %p105 = scmp.lt.s32.totalorder %s18, 3
      %p106 = pnand %p104, %p105
      %p107 = pneg %p106
      // Predicated region
      $region9: #{tpu_custom_call.1} parent=5 // pred_check
        _
      $region10: #{tpu_custom_call.1} parent=5 // pred_check_branch
        %109 = sbr.rel (%p106) target = $region12
      $region11: #{tpu_custom_call.1} parent=5 // pred_region
        %s110 = ssub.s32 %s18, 1
      $region12: #{tpu_custom_call.1} parent=5 // pred_fallthru
        _
      %p111 = scmp.lt.s32.totalorder %s18, 2
      // Predicated region
      $region13: #{tpu_custom_call.1} parent=5 // pred_check
        %p112 = pneg %p111
      $region14: #{tpu_custom_call.1} parent=5 // pred_check_branch
        %114 = sbr.rel (%p112) target = $region16
      $region15: #{tpu_custom_call.1} parent=5 // pred_region
        // Predicated region
        $region17: #{tpu_custom_call.1} parent=15 // pred_check
          %p115 = pneg %p38
        $region18: #{tpu_custom_call.1} parent=15 // pred_check_branch
          %117 = sbr.rel (%p115) target = $region20
        $region19: #{tpu_custom_call.1} parent=15 // pred_region
          %s118 = sand.u32 %s28, 1
          %s119 = scalar_lea.sflag [#allocation3], %s118
          %s120 = sand.u32 %s28, 1
          %s121 = smul.addr %s120, 24
          %s122 = scalar_lea.vmem [#allocation2], %s121
          %s124 = ssub.s32 384, 384
          %125 = vsyncadd %s119, %s124
          %s126 = smul.addr %s18, 3
          %s127 = smul.addr %s126, 128
          %s128 = scalar_lea.hbm %s0, %s127
          %s129 = sshll.u32 %s122, 4
          %s130 = int_to_ptr.vmem [resolvable:$true] %s129
          %135 = dma.hbm_to_vmem [thread:$0]  %s128, 384, %s130, %s119, 128, 128, 8
        $region20: #{tpu_custom_call.1} parent=15 // pred_fallthru
          _
      $region16: #{tpu_custom_call.1} parent=5 // pred_fallthru
        _
      %p136 = scmp.le.s32.totalorder 1, %s18
      %p137 = scmp.lt.s32.totalorder %s18, 3
      %p138 = pnand %p136, %p137
      %p139 = pneg %p138
      // Predicated region
      $region21: #{tpu_custom_call.1} parent=5 // pred_check
        _
      $region22: #{tpu_custom_call.1} parent=5 // pred_check_branch
        %141 = sbr.rel (%p138) target = $region24
      $region23: #{tpu_custom_call.1} parent=5 // pred_region
        %s142 = ssub.s32 %s18, 1
        %s143 = sand.u32 %s31, 1
        %s144 = scalar_lea.sflag [#allocation3], %s143
        %s145 = sand.u32 %s31, 1
        %s146 = smul.addr %s145, 24
        %s147 = scalar_lea.vmem [#allocation2], %s146
        // Predicated region
        $region25: #{tpu_custom_call.1} parent=23 // pred_check
          %p148 = pneg %p44
        $region26: #{tpu_custom_call.1} parent=23 // pred_check_branch
          %150 = sbr.rel (%p148) target = $region28
        $region27: #{tpu_custom_call.1} parent=23 // pred_region
          %151 = dma.done %s144, 384
        $region28: #{tpu_custom_call.1} parent=23 // pred_fallthru
          _
        %s152 = sand.u32 %s31, 1
        %s153 = scalar_lea.sflag [#allocation3], %s152
        %s154 = sand.u32 %s31, 1
        %s155 = smul.addr %s154, 24
        %s156 = scalar_lea.vmem [#allocation2], %s155
        %p157 = pneg %p44
        %p158 = pneg %p41
        %p159 = pneg %p70
        %p160 = pneg %p67
        %s161 = sand.u32 %s57, 1
        %s162 = scalar_lea.sflag [#allocation4], %s161
        %s163 = sand.u32 %s57, 1
        %s164 = smul.addr %s163, 16
        %s165 = scalar_lea.vmem [#allocation5], %s164
        %p166 = pneg %p96
        %p167 = pneg %p93
        %s168 = sand.u32 %s83, 1
        %s169 = scalar_lea.sflag [#allocation7], %s168
        %s170 = sand.u32 %s83, 1
        %s171 = smul.addr %s170, 8
        %s172 = scalar_lea.vmem [#allocation6], %s171
        %v173 = vld [vmem:[%s147] sm:$0xff]
        %v174 = vld [vmem:[%s147 + $0x8] sm:$0xff]
        %v175 = vld [vmem:[%s147 + $0x10] sm:$0xff]
        %v176 = vmax.f32 %v173, %v174
        %v177 = vmax.f32 %v176, %v175
        %v178 = vmin.f32 %v173, %v174
        %v179 = vmin.f32 %v178, %v175
        %v180 = vsub.f32 %v177, %v179
        %vm181 = vcmp.gt.f32.partialorder %v180, 0.0
        %vm182 = vcmp.gt.f32.partialorder %v177, 0.0
        %v183 = vsel %vm182, %v177, 1.0
        %v184 = vrcp.pop %v183
        %v185 = vmul.f32 %v180, %v184
        %v186 = vsel %vm182, %v185, 0.0
        %v187 = vsel %vm181, %v180, 1.0
        %v188 = vrcp.pop %v187
        %v189 = vmul.f32 1.0, %v188
        %v190 = vsub.f32 %v174, %v175
        %v191 = vmul.f32 %v190, %v189
        %vm192 = vcmp.lt.f32.partialorder %v191, 0.0
        %v193 = vadd.f32 %v191, 6.0
        %v194 = vsel %vm192, %v193, %v191
        %v195 = vsub.f32 %v175, %v173
        %v196 = vmul.f32 %v195, %v189
        %v197 = vadd.f32 %v196, 2.0
        %v198 = vsub.f32 %v173, %v174
        %v199 = vmul.f32 %v198, %v189
        %v200 = vadd.f32 %v199, 4.0
        %vm201 = vcmp.eq.f32.partialorder %v177, %v173
        %v202 = vsel %vm201, %v194, 0.0
        %vm203 = vcmp.eq.f32.partialorder %v177, %v174
        %v204 = vsel %vm203, %v197, %v202
        %vm205 = vcmp.eq.f32.partialorder %v177, %v175
        %v206 = vsel %vm205, %v200, %v204
        %v207 = vsel %vm181, %v206, 0.0
        %v208 = vmul.f32 %v207, 0.16666667
        %v209 = vmul.f32 %v208, %v208
        %210 = vadd.xlane.f32.xlu0 %v209
        %v211 = vpop.xlane.xlu0 %210
        %v212 = vrot.slane %v211, 4
        %v213 = vadd.f32 %v211, %v212
        %v214 = vrot.slane %v213, 2
        %v215 = vadd.f32 %v213, %v214
        %v216 = vrot.slane %v215, 1
        %v217 = vadd.f32 %v215, %v216
        %v218 = vmax.f32 %v217, 1e-24
        %v219 = vrsqrt.pop %v218
        %v220 = vmul.f32 %v208, %v219
        %221 = vst [vmem:[%s165] sm:$0xff] %v220
        %v222 = vmul.f32 %v186, %v186
        %223 = vadd.xlane.f32.xlu0 %v222
        %v224 = vpop.xlane.xlu0 %223
        %v225 = vrot.slane %v224, 4
        %v226 = vadd.f32 %v224, %v225
        %v227 = vrot.slane %v226, 2
        %v228 = vadd.f32 %v226, %v227
        %v229 = vrot.slane %v228, 1
        %v230 = vadd.f32 %v228, %v229
        %v231 = vmax.f32 %v230, 1e-24
        %v232 = vrsqrt.pop %v231
        %v233 = vmul.f32 %v186, %v232
        %s234 = scalar_lea.vmem %s165, 8 [#allocation5]
        %235 = vst [vmem:[%s234] sm:$0xff] %v233
        %v236 = vmul.f32 %v177, %v177
        %237 = vadd.xlane.f32.xlu0 %v236
        %v238 = vpop.xlane.xlu0 %237
        %v239 = vrot.slane %v238, 4
        %v240 = vadd.f32 %v238, %v239
        %v241 = vrot.slane %v240, 2
        %v242 = vadd.f32 %v240, %v241
        %v243 = vrot.slane %v242, 1
        %v244 = vadd.f32 %v242, %v243
        %v245 = vmax.f32 %v244, 1e-24
        %v246 = vrsqrt.pop %v245
        %v247 = vmul.f32 %v177, %v246
        %248 = vst [vmem:[%s172] sm:$0xff] %v247
        %s249 = sand.u32 %s57, 1
        %s250 = scalar_lea.sflag [#allocation4], %s249
        %s251 = sand.u32 %s57, 1
        %s252 = smul.addr %s251, 16
        %s253 = scalar_lea.vmem [#allocation5], %s252
        %s254 = sand.u32 %s83, 1
        %s255 = scalar_lea.sflag [#allocation7], %s254
        %s256 = sand.u32 %s83, 1
        %s257 = smul.addr %s256, 8
        %s258 = scalar_lea.vmem [#allocation6], %s257
        // Predicated region
        $region29: #{tpu_custom_call.1} parent=23 // pred_check
          %p259 = pneg %p67
        $region30: #{tpu_custom_call.1} parent=23 // pred_check_branch
          %261 = sbr.rel (%p259) target = $region32
        $region31: #{tpu_custom_call.1} parent=23 // pred_region
          %s263 = ssub.s32 256, 256
          %264 = vsyncadd %s250, %s263
          %s265 = smul.addr %s23, 2
          %s266 = smul.addr %s265, 128
          %s267 = scalar_lea.hbm %s1, %s266
          %s268 = sshll.u32 %s253, 4
          %s269 = int_to_ptr.vmem [resolvable:$true] %s268
          %274 = dma.vmem_to_hbm [thread:$0]  %s269, 256, %s267, %s250, 128, 128, 8
        $region32: #{tpu_custom_call.1} parent=23 // pred_fallthru
          _
        // Predicated region
        $region33: #{tpu_custom_call.1} parent=23 // pred_check
          %p275 = pneg %p93
        $region34: #{tpu_custom_call.1} parent=23 // pred_check_branch
          %277 = sbr.rel (%p275) target = $region36
        $region35: #{tpu_custom_call.1} parent=23 // pred_region
          %s279 = ssub.s32 128, 128
          %280 = vsyncadd %s255, %s279
          %s281 = smul.addr %s23, 128
          %s282 = scalar_lea.hbm %s2, %s281
          %s284 = sshll.u32 %s258, 4
          %s285 = int_to_ptr.vmem [resolvable:$true] %s284
          %287 = dma.vmem_to_hbm [thread:$0]  %s285, 128, %s282, %s255
        $region36: #{tpu_custom_call.1} parent=23 // pred_fallthru
          _
      $region24: #{tpu_custom_call.1} parent=5 // pred_fallthru
        _
      %p288 = scmp.le.s32.totalorder 2, %s18
      // Predicated region
      $region37: #{tpu_custom_call.1} parent=5 // pred_check
        %p289 = pneg %p288
      $region38: #{tpu_custom_call.1} parent=5 // pred_check_branch
        %291 = sbr.rel (%p289) target = $region40
      $region39: #{tpu_custom_call.1} parent=5 // pred_region
        %s292 = ssub.s32 %s18, 2
        // Predicated region
        $region41: #{tpu_custom_call.1} parent=39 // pred_check
          %p293 = pneg %p73
        $region42: #{tpu_custom_call.1} parent=39 // pred_check_branch
          %295 = sbr.rel (%p293) target = $region44
        $region43: #{tpu_custom_call.1} parent=39 // pred_region
          %s296 = sand.u32 %s58, 1
          %s297 = scalar_lea.sflag [#allocation4], %s296
          %s298 = sand.u32 %s58, 1
          %s299 = smul.addr %s298, 16
          %s300 = scalar_lea.vmem [#allocation5], %s299
          %301 = dma.done %s297, 256
        $region44: #{tpu_custom_call.1} parent=39 // pred_fallthru
          _
        // Predicated region
        $region45: #{tpu_custom_call.1} parent=39 // pred_check
          %p302 = pneg %p99
        $region46: #{tpu_custom_call.1} parent=39 // pred_check_branch
          %304 = sbr.rel (%p302) target = $region48
        $region47: #{tpu_custom_call.1} parent=39 // pred_region
          %s305 = sand.u32 %s84, 1
          %s306 = scalar_lea.sflag [#allocation7], %s305
          %s307 = sand.u32 %s84, 1
          %s308 = smul.addr %s307, 8
          %s309 = scalar_lea.vmem [#allocation6], %s308
          %310 = dma.done %s306, 128
        $region48: #{tpu_custom_call.1} parent=39 // pred_fallthru
          _
      $region40: #{tpu_custom_call.1} parent=5 // pred_fallthru
        _
    $region6: #{tpu_custom_call.1} parent=1 // loop_footer
      %s22 = sadd.s32 1, %s18
    $region7: #{tpu_custom_call.1} parent=1 // loop_footer_branch
      %17 = sbr.rel target = $region3
    $region8: #{tpu_custom_call.1} parent=1 // loop_exit
      _
    %311 = vsyncpa [#allocation3], 1
    %s312 = scalar_lea.sflag [#allocation3], 1
    %313 = vsyncpa %s312, 1
    %314 = vsyncpa [#allocation4], 1
    %s315 = scalar_lea.sflag [#allocation4], 1
    %316 = vsyncpa %s315, 1
    %317 = vsyncpa [#allocation7], 1
    %s318 = scalar_lea.sflag [#allocation7], 1
    %319 = vsyncpa %s318, 1

</llo_original>
